<compile_context>
chip_gen: v5e
topology: v5e:2x2
jax: 0.10.0
libtpu: 0.0.40
codegen_flags: <defaults>
</compile_context>

<pallas_src>
import jax
import jax.numpy as jnp
from jax.experimental import pallas as pl
from jax.experimental.pallas import tpu as pltpu

_MAX_TILE_BYTES = 2 * 1024 * 1024  # per-input tile; 4x (in+out double-buffer) = 8 MiB


def _add5_kernel(x_ref, o_ref):
    # One lane-dense tile in VMEM: 1 vld + 1 vadd + 1 vst per vreg, DMA-bound.
    o_ref[...] = x_ref[...] + jnp.asarray(5, dtype=o_ref.dtype)


def _sublane_multiple(dtype):
    # Sub-32-bit dtypes pack along sublanes: 8 rows for 4-byte, 16 for 2-byte,
    # 32 for 1-byte elements.
    itemsize = jnp.dtype(dtype).itemsize
    return max(8, 32 // itemsize)


def pt_module_forward(x):
    """Equivalent of PtModule.forward: stack([x[i] + 5 for i in range(B)])."""
    orig_shape = x.shape
    dtype = x.dtype
    total = x.size
    itemsize = jnp.dtype(dtype).itemsize
    sub = _sublane_multiple(dtype)

    # --- choose a lane-dense 2-D view without padding when possible ----------
    lane = None
    for cand in (512, 256, 128):
        if total % cand == 0:
            lane = cand
            break

    pad_tail = 0
    if lane is None:
        # Rare path: flat size not a multiple of 128 — pad only a sub-row tail.
        lane = 128
        pad_tail = (-total) % lane

    flat = x.reshape(-1)
    if pad_tail:
        flat = jnp.pad(flat, (0, pad_tail))
    padded_total = total + pad_tail
    rows = padded_total // lane
    x2d = flat.reshape(rows, lane)

    # --- tiling ----------------------------------------------------------------
    if rows * lane * itemsize <= _MAX_TILE_BYTES:
        # Whole slab in one block: block_shape == full array dims (always legal),
        # grid=(1,), zero auxiliary ops.
        row_blk = rows
        grid_rows = 1
    else:
        # Sublane-aligned row blocks; Pallas masks the non-divisible last block,
        # so no row padding is ever needed.  Large inputs naturally get
        # grid_rows >= 2, letting both v7x TensorCores share the parallel axis.
        row_blk = max(sub, (_MAX_TILE_BYTES // (lane * itemsize)) // sub * sub)
        grid_rows = pl.cdiv(rows, row_blk)

    out2d = pl.pallas_call(
        _add5_kernel,
        out_shape=jax.ShapeDtypeStruct((rows, lane), dtype),
        grid=(grid_rows,),
        in_specs=[pl.BlockSpec((row_blk, lane), lambda i: (i, 0))],
        out_specs=pl.BlockSpec((row_blk, lane), lambda i: (i, 0)),
        compiler_params=pltpu.CompilerParams(
            dimension_semantics=("parallel",),
        ),
        cost_estimate=pl.CostEstimate(
            flops=padded_total,
            transcendentals=0,
            bytes_accessed=2 * padded_total * itemsize,
        ),
    )(x2d)

    out_flat = out2d.reshape(-1)
    if pad_tail:
        out_flat = out_flat[:total]
    return out_flat.reshape(orig_shape)


if __name__ == "__main__":
    key = jax.random.PRNGKey(0)
    x = jax.random.normal(key, (2, 4, 16, 16), dtype=jnp.float32)

    out = pt_module_forward(x)
    out = jax.block_until_ready(out)

    # Reference check (plain JAX): stack of per-batch adds == x + 5.
    ref = x + 5.0
    assert out.shape == x.shape and out.dtype == x.dtype
    assert jnp.allclose(out, ref), "mismatch vs reference"

    print("KERNEL_OK")
</pallas_src>

<mosaic_0001>
module attributes {stable_mosaic.version = 11 : i64} {
  func.func @_add5_kernel(%arg0: i32, %arg1: memref<4x512xf32, #tpu.memory_space<vmem>>, %arg2: memref<4x512xf32, #tpu.memory_space<vmem>>) attributes {dimension_semantics = [#tpu.dimension_semantics<parallel>], iteration_bounds = array<i64: 1>, scalar_prefetch = 0 : i64, scratch_operands = 0 : i64, tpu.core_type = #tpu.core_type<tc>, window_params = [{transform_indices = @transform_0, window_bounds = array<i64: 4, 512>}, {transform_indices = @transform_1, window_bounds = array<i64: 4, 512>}]} {
    %c0 = arith.constant 0 : index
    %c0_0 = arith.constant 0 : index
    %0 = vector.load %arg1[%c0, %c0_0] : memref<4x512xf32, #tpu.memory_space<vmem>>, vector<4x512xf32>
    %cst = arith.constant 5.000000e+00 : f32
    %1 = vector.broadcast %cst : f32 to vector<4x512xf32>
    %2 = arith.addf %0, %1 : vector<4x512xf32>
    %c0_1 = arith.constant 0 : index
    %c0_2 = arith.constant 0 : index
    %3 = vector.load %arg2[%c0_1, %c0_2] : memref<4x512xf32, #tpu.memory_space<vmem>>, vector<4x512xf32>
    tpu.vector_store %arg2[%c0_1, %c0_2], %2 {strides = array<i32>} : memref<4x512xf32, #tpu.memory_space<vmem>>, vector<4x512xf32>,
    return
  }
  func.func @transform_0(%arg0: i32) -> (i32, i32) {
    %c0_i32 = arith.constant 0 : i32
    %c0_i32_0 = arith.constant 0 : i32
    return %arg0, %c0_i32 : i32, i32
  }
  func.func @transform_1(%arg0: i32) -> (i32, i32) {
    %c0_i32 = arith.constant 0 : i32
    %c0_i32_0 = arith.constant 0 : i32
    return %arg0, %c0_i32 : i32, i32
  }
}

</mosaic_0001>

<llo_original>
// kernel: tpu_custom_call.1
$region0: #{tpu_custom_call.1}
  #allocation0 [shape = 'u32[]', space=smem, size = 0x4, offset = 0x4, fixed_abs, tag = 'smem constant byte address 0x4 - core index']
  #allocation1 [shape = 'u32[72,128]{1,0:T(1,128)}', space=vmem, size = 0x9000, scoped, tag = 'internal scratch']
  %s0 = inlined_call_operand.hbm [shape: f32[4,512], index: 0, kind: input, shape index: {}]
  %s1 = inlined_call_operand.hbm [shape: f32[4,512], index: 1, kind: output, shape index: {}]
  %s2 = sld [smem:[#allocation0]]
  $region18: #{tpu_custom_call.1} parent=0
    _
  %s4 = ssub.s32 1, %s2
  %s5 = scalar_select 0, %s4, %s2
  $region1: #{tpu_custom_call.1} parent=0
    #allocation2 [shape = 'u8[8192]{0}', space=vmem, size = 0x2000, scoped, tag = 'input window, operand 0, single buffered']
    #allocation3 [shape = 's32[1]{0}', space=sflag, size = 0x4, scoped, tag = 'scoped memory for tpu_custom_call.1']
    #allocation4 [shape = 's32[1]{0}', space=sflag, size = 0x4, scoped, tag = 'scoped memory for tpu_custom_call.1']
    #allocation5 [shape = 'u8[8192]{0}', space=vmem, size = 0x2000, scoped, tag = 'output window, operand 0, single buffered']
    %6 = vsyncpa [#allocation3], 0
    %7 = vsyncpa [#allocation4], 0
    // Predicated region
    $region2: #{tpu_custom_call.1} parent=1 // pred_check
      _
    $region3: #{tpu_custom_call.1} parent=1 // pred_check_branch
      %9 = sbr.rel (0) target = $region5
    $region4: #{tpu_custom_call.1} parent=1 // pred_region
      %11 = vsyncadd [#allocation3], 0
      %s13 = sshll.u32 %s0, 4
      %s14 = int_to_ptr.hbm [resolvable:$true] %s13
      %s15 = sshll.u32 [#allocation2], 4
      %s16 = int_to_ptr.vmem [resolvable:$true] %s15
      %18 = dma.hbm_to_vmem [thread:$0]  %s14, 256, %s16, [#allocation3]
    $region5: #{tpu_custom_call.1} parent=1 // pred_fallthru
      _
    // Predicated region
    $region6: #{tpu_custom_call.1} parent=1 // pred_check
      _
    $region7: #{tpu_custom_call.1} parent=1 // pred_check_branch
      %20 = sbr.rel (0) target = $region9
    $region8: #{tpu_custom_call.1} parent=1 // pred_region
      %22 = dma.done [#allocation3], 256
    $region9: #{tpu_custom_call.1} parent=1 // pred_fallthru
      _
    %v23 = vld [vmem:[#allocation2] sm:$0xff]
    %v24 = vld [vmem:[#allocation2 + $0x8] sm:$0xff]
    %v25 = vadd.f32 %v23, 5.0
    %v26 = vadd.f32 %v24, 5.0
    %27 = vst [vmem:[#allocation5] sm:$0xff] %v25
    %28 = vst [vmem:[#allocation5 + $0x8] sm:$0xff] %v26
    // Predicated region
    $region10: #{tpu_custom_call.1} parent=1 // pred_check
      _
    $region11: #{tpu_custom_call.1} parent=1 // pred_check_branch
      %30 = sbr.rel (0) target = $region13
    $region12: #{tpu_custom_call.1} parent=1 // pred_region
      %32 = vsyncadd [#allocation4], 0
      %s34 = sshll.u32 [#allocation5], 4
      %s35 = int_to_ptr.vmem [resolvable:$true] %s34
      %s36 = sshll.u32 %s1, 4
      %s37 = int_to_ptr.hbm [resolvable:$true] %s36
      %39 = dma.vmem_to_hbm [thread:$0]  %s35, 256, %s37, [#allocation4]
    $region13: #{tpu_custom_call.1} parent=1 // pred_fallthru
      _
    // Predicated region
    $region14: #{tpu_custom_call.1} parent=1 // pred_check
      _
    $region15: #{tpu_custom_call.1} parent=1 // pred_check_branch
      %41 = sbr.rel (0) target = $region17
    $region16: #{tpu_custom_call.1} parent=1 // pred_region
      %43 = dma.done [#allocation4], 256
    $region17: #{tpu_custom_call.1} parent=1 // pred_fallthru
      _
    %44 = vsyncpa [#allocation3], 1
    %45 = vsyncpa [#allocation4], 1

</llo_original>
